<compile_context>
chip_gen: v7x
topology: tpu7x:2x2x1
jax: 0.10.0
libtpu: 0.0.40
codegen_flags: <defaults>
</compile_context>

<pallas_src>
import functools

import jax
import jax.numpy as jnp
from jax.experimental import pallas as pl
from jax.experimental.pallas import tpu as pltpu


def _pixel_norm_kernel(x_ref, o_ref, *, epsilon):
    # x_ref / o_ref: VMEM blocks of shape (B_TILE, C, HW_TILE); channel axis = 1.
    x = x_ref[...].astype(jnp.float32)
    mean_sq = jnp.mean(x * x, axis=1, keepdims=True)       # (B_TILE, 1, HW_TILE) sublane reduce
    inv = jax.lax.rsqrt(mean_sq + epsilon)                  # EUP slot (free vs. mem-bound body)
    # Re-read the ref for the apply so the f32 upcast copy does not have to stay live
    # across the reduction (halves peak f32 temporaries for sub-32-bit inputs).
    o_ref[...] = (x_ref[...].astype(jnp.float32) * inv).astype(o_ref.dtype)


def _vmem_capacity_bytes():
    """Physical VMEM of the current generation; conservative fallback if unqueryable."""
    try:
        return int(pltpu.get_tpu_info().vmem_capacity_bytes)
    except Exception:
        return 64 << 20  # v7x per-TensorCore VMEM (the smallest of v5e/v6e/v7x)


def _choose_tiling(Bp, C, HWp, itemsize, block_budget, min_steps=4):
    """Pick (b_tile, hw_tile) with hw_tile a 128-multiple divisor of HWp (or HWp itself),
    b_tile a divisor of Bp, block bytes <= block_budget, preferring >= min_steps grid
    steps and then the biggest block."""
    hw_cands = [t for t in range(128, HWp + 1, 128) if HWp % t == 0]
    if not hw_cands:
        # HWp < 128 or not a 128-multiple: block covers the full lane dim (legal: full-extent).
        hw_cands = [HWp]
    b_cands = [bt for bt in range(1, Bp + 1) if Bp % bt == 0]

    fitting = []
    for hw_t in hw_cands:
        for b_t in b_cands:
            nbytes = b_t * C * hw_t * itemsize
            if nbytes > block_budget:
                continue
            steps = (Bp // b_t) * (HWp // hw_t)
            # Prefer more steps up to min_steps (megacore + pipelining), then bigger blocks.
            fitting.append((min(steps, min_steps), nbytes, b_t, hw_t))
    if fitting:
        _, _, b_t, hw_t = max(fitting)
        return b_t, hw_t
    # Even the smallest legal block overflows the budget (very wide C). Fall back to the
    # minimal block; vmem_limit_bytes below is generous so this still compiles for sane C.
    # TODO(synk): for extreme C, split the channel reduce over an extra "arbitrary" grid
    # axis with a two-pass (sum-of-squares, then scale) scheme.
    return 1, min(hw_cands)


def _pixel_norm_3d(x3, epsilon):
    """x3: [Bp, C, HWp]; normalizes over axis=1 per (batch, lane) column."""
    Bp, C, HWp = x3.shape
    itemsize = x3.dtype.itemsize

    vmem_cap = _vmem_capacity_bytes()
    # ~48 MiB on v7x (64 MiB physical), ~96 MiB on v5e/v6e (128 MiB physical).
    vmem_limit = int(min((vmem_cap * 3) // 4, 96 << 20))
    # Resident cost per block: (in + out) x double-buffer = 4 blocks in the input dtype,
    # plus ~2 f32-sized temporaries for the upcast/reduce inside the kernel.
    per_block_factor = 4 + 2 * max(1, 4 // itemsize)
    block_budget = max(128 * itemsize * C, min(4 << 20, vmem_limit // per_block_factor))

    b_tile, hw_tile = _choose_tiling(Bp, C, HWp, itemsize, block_budget)
    grid = (Bp // b_tile, HWp // hw_tile)

    n = Bp * C * HWp
    cost = pl.CostEstimate(
        flops=3 * n,                       # square, reduce, scale
        transcendentals=Bp * HWp,          # one rsqrt per (batch, pixel)
        bytes_accessed=2 * n * itemsize,   # 1 read + 1 write per element
    )

    return pl.pallas_call(
        functools.partial(_pixel_norm_kernel, epsilon=float(epsilon)),
        out_shape=jax.ShapeDtypeStruct((Bp, C, HWp), x3.dtype),
        grid=grid,
        in_specs=[pl.BlockSpec((b_tile, C, hw_tile), lambda b, t: (b, 0, t))],
        out_specs=pl.BlockSpec((b_tile, C, hw_tile), lambda b, t: (b, 0, t)),
        compiler_params=pltpu.CompilerParams(
            dimension_semantics=("parallel", "parallel"),
            vmem_limit_bytes=vmem_limit,
        ),
        cost_estimate=cost,
    )(x3)


def pixel_norm_forward(x, epsilon=1e-8):
    """x: [B, C, H, W] (NCHW, same as PyTorch). Returns x * rsqrt(mean_c(x^2) + eps)."""
    B, C, H, W = x.shape
    HW = H * W
    if HW % 128 == 0:
        # Lane-dense without any data movement: reshape is a view of the NCHW layout.
        x3 = x.reshape(B, C, HW)
        out3 = _pixel_norm_3d(x3, epsilon)
        return out3.reshape(B, C, H, W)
    # Small / odd spatial stages (4x4, 8x8, ...): one cheap layout change so B*HW
    # contiguous elements sit on the lane axis and the channel reduce is on sublanes.
    # These stages are latency-dominated, so the wrapper transpose cost is negligible.
    xt = jnp.transpose(x.reshape(B, C, HW), (1, 0, 2)).reshape(1, C, B * HW)
    ot = _pixel_norm_3d(xt, epsilon)
    return jnp.transpose(ot.reshape(C, B, HW), (1, 0, 2)).reshape(B, C, H, W)


def _reference(x, epsilon):
    return x * jax.lax.rsqrt(jnp.mean(x * x, axis=1, keepdims=True) + epsilon)


if __name__ == "__main__":
    # Module config: settings['epsilon']; small NCHW input.
    B, C, size = 2, 4, 16
    epsilon = 1e-8

    key = jax.random.PRNGKey(0)
    x = jax.random.normal(key, (B, C, size, size), dtype=jnp.float32)

    out = jax.block_until_ready(pixel_norm_forward(x, epsilon))
    ref = _reference(x, epsilon)
    assert out.shape == (B, C, size, size)
    assert jnp.allclose(out, ref, atol=1e-6, rtol=1e-6)

    # Also exercise the small-feature-map (HW < 128) fallback path once.
    x_small = jax.random.normal(jax.random.PRNGKey(0), (B, C, 8, 8), dtype=jnp.float32)
    out_small = jax.block_until_ready(pixel_norm_forward(x_small, epsilon))
    assert jnp.allclose(out_small, _reference(x_small, epsilon), atol=1e-6, rtol=1e-6)

    print("KERNEL_OK")
</pallas_src>

<mosaic_0001>
module attributes {stable_mosaic.version = 11 : i64} {
  func.func @_pixel_norm_kernel(%arg0: i32, %arg1: i32, %arg2: memref<1x4x128xf32, #tpu.memory_space<vmem>>, %arg3: memref<1x4x128xf32, #tpu.memory_space<vmem>>) attributes {dimension_semantics = [#tpu.dimension_semantics<parallel>, #tpu.dimension_semantics<parallel>], iteration_bounds = array<i64: 2, 2>, scalar_prefetch = 0 : i64, scratch_operands = 0 : i64, tpu.core_type = #tpu.core_type<tc>, window_params = [{transform_indices = @transform_0, window_bounds = array<i64: 1, 4, 128>}, {transform_indices = @transform_1, window_bounds = array<i64: 1, 4, 128>}]} {
    %c0 = arith.constant 0 : index
    %c0_0 = arith.constant 0 : index
    %c0_1 = arith.constant 0 : index
    %0 = vector.load %arg2[%c0, %c0_0, %c0_1] : memref<1x4x128xf32, #tpu.memory_space<vmem>>, vector<1x4x128xf32>
    %1 = arith.mulf %0, %0 : vector<1x4x128xf32>
    %cst = arith.constant dense<0.000000e+00> : vector<1x128xf32>
    %2 = vector.multi_reduction <add>, %1, %cst [1] : vector<1x4x128xf32> to vector<1x128xf32>
    %3 = vector.shape_cast %2 : vector<1x128xf32> to vector<1x1x128xf32>
    %cst_2 = arith.constant 4.000000e+00 : f32
    %4 = vector.broadcast %cst_2 : f32 to vector<1x1x128xf32>
    %5 = arith.divf %3, %4 : vector<1x1x128xf32>
    %cst_3 = arith.constant 9.99999993E-9 : f32
    %6 = vector.broadcast %cst_3 : f32 to vector<1x1x128xf32>
    %7 = arith.addf %5, %6 : vector<1x1x128xf32>
    %8 = math.rsqrt %7 : vector<1x1x128xf32>
    %c0_4 = arith.constant 0 : index
    %c0_5 = arith.constant 0 : index
    %c0_6 = arith.constant 0 : index
    %9 = vector.load %arg2[%c0_4, %c0_5, %c0_6] : memref<1x4x128xf32, #tpu.memory_space<vmem>>, vector<1x4x128xf32>
    %10 = vector.broadcast %8 : vector<1x1x128xf32> to vector<1x4x128xf32>
    %11 = arith.mulf %9, %10 : vector<1x4x128xf32>
    %c0_7 = arith.constant 0 : index
    %c0_8 = arith.constant 0 : index
    %c0_9 = arith.constant 0 : index
    %12 = vector.load %arg3[%c0_7, %c0_8, %c0_9] : memref<1x4x128xf32, #tpu.memory_space<vmem>>, vector<1x4x128xf32>
    tpu.vector_store %arg3[%c0_7, %c0_8, %c0_9], %11 {strides = array<i32>} : memref<1x4x128xf32, #tpu.memory_space<vmem>>, vector<1x4x128xf32>,
    return
  }
  func.func @transform_0(%arg0: i32, %arg1: i32) -> (i32, i32, i32) {
    %c0_i32 = arith.constant 0 : i32
    %c0_i32_0 = arith.constant 0 : i32
    return %arg0, %c0_i32, %arg1 : i32, i32, i32
  }
  func.func @transform_1(%arg0: i32, %arg1: i32) -> (i32, i32, i32) {
    %c0_i32 = arith.constant 0 : i32
    %c0_i32_0 = arith.constant 0 : i32
    return %arg0, %c0_i32, %arg1 : i32, i32, i32
  }
}

</mosaic_0001>

<llo_original>
// kernel: tpu_custom_call.1
$region0: #{tpu_custom_call.1}
  #allocation0 [shape = 'u32[]', space=smem, size = 0x4, offset = 0x4, fixed_abs, tag = 'smem constant byte address 0x4 - core index']
  #allocation1 [shape = 'u32[144,128]{1,0:T(1,128)}', space=vmem, size = 0x12000, scoped, tag = 'internal scratch']
  %s0 = inlined_call_operand.hbm [shape: f32[2,4,256], index: 0, kind: input, shape index: {}]
  %s1 = inlined_call_operand.hbm [shape: f32[2,4,256], index: 1, kind: output, shape index: {}]
  %s2 = sld [smem:[#allocation0]]
  $region41: #{tpu_custom_call.1} parent=0
    _
  %s4 = ssub.s32 1, %s2
  %s5 = scalar_select 0, %s4, %s2
  $region1: #{tpu_custom_call.1} parent=0
    #allocation2 [shape = 'u8[4096]{0}', space=vmem, size = 0x1000, scoped, tag = 'input window, operand 0']
    #allocation3 [shape = 's32[2]{0}', space=sflag, size = 0x8, scoped, tag = 'scoped memory for tpu_custom_call.1']
    #allocation4 [shape = 's32[2]{0}', space=sflag, size = 0x8, scoped, tag = 'scoped memory for tpu_custom_call.1']
    #allocation5 [shape = 'u8[4096]{0}', space=vmem, size = 0x1000, scoped, tag = 'output window, operand 0']
    %6 = vsyncpa [#allocation3], 0
    %s7 = scalar_lea.sflag [#allocation3], 1
    %8 = vsyncpa %s7, 0
    %9 = vsyncpa [#allocation4], 0
    %s10 = scalar_lea.sflag [#allocation4], 1
    %11 = vsyncpa %s10, 0
    loop: start=0, step=1, limit=6
    $region2: #{tpu_custom_call.1} parent=1 // loop_pre_header
      _
    $region3: #{tpu_custom_call.1} parent=1 // loop_header
      %s13 = sphi 0, %s17
      %p14 = scmp.ge.s32.totalorder %s13, 6
      %s20 = sphi 0, %s32
      %s21 = sphi 0, %s28
      %s22 = sphi 0, %s20
      %s23 = sphi 0, %s21
      %s24 = sphi 0, %s22
      %s25 = sphi 0, %s23
      %s37 = sphi 0, %s39
      %s40 = sphi 0, %s37
      %s41 = sphi 0, %s40
      %s57 = sphi 0, %s41
      %s65 = sphi 0, %s67
      %s68 = sphi 0, %s65
      %s69 = sphi 0, %s68
      %s85 = sphi 0, %s69
    $region4: #{tpu_custom_call.1} parent=1 // loop_header_branch
      %16 = sbr.rel (%p14) target = $region8
    $region5: #{tpu_custom_call.1} parent=1 // loop_body
      %s18 = ssub.s32 %s13, 1
      %s19 = ssub.s32 %s13, 2
      %s26 = sadd.s32 1, %s21
      %p27 = scmp.ge.s32.totalorder %s26, 2
      %s28 = scalar_select %p27, 0, %s26
      %s29 = sadd.s32 1, %s20
      %s30 = scalar_select %p27, %s29, %s20
      %p31 = scmp.ge.s32.totalorder %s30, 2
      %s32 = scalar_select %p31, 0, %s30
      %s33 = ssub.s32 %s20, %s32
      %s34 = ssub.s32 %s21, %s28
      %s35 = sor.u32 %s33, %s34
      %p36 = scmp.eq.s32.totalorder %s35, 0
      %s38 = sadd.s32 %s37, 1
      %s39 = scalar_select %p36, %s37, %s38
      %p42 = pneg %p36
      %p43 = scmp.eq.s32.totalorder %s13, 3
      %p44 = por %p42, %p43
      %p45 = scmp.ne.s32.totalorder %s37, %s40
      %p46 = scmp.eq.s32.totalorder %s13, 0
      %p47 = por %p45, %p46
      %p48 = scmp.ne.s32.totalorder %s37, %s40
      %p49 = scmp.eq.s32.totalorder %s18, 3
      %p50 = por %p48, %p49
      %p51 = scmp.ne.s32.totalorder %s40, %s41
      %p52 = scmp.eq.s32.totalorder %s18, 0
      %p53 = por %p51, %p52
      %p54 = scmp.ne.s32.totalorder %s40, %s41
      %p55 = scmp.eq.s32.totalorder %s19, 3
      %p56 = por %p54, %p55
      %p58 = scmp.ne.s32.totalorder %s41, %s57
      %p59 = scmp.eq.s32.totalorder %s19, 0
      %p60 = por %p58, %p59
      %s61 = ssub.s32 %s20, %s32
      %s62 = ssub.s32 %s21, %s28
      %s63 = sor.u32 %s61, %s62
      %p64 = scmp.eq.s32.totalorder %s63, 0
      %s66 = sadd.s32 %s65, 1
      %s67 = scalar_select %p64, %s65, %s66
      %p70 = pneg %p64
      %p71 = scmp.eq.s32.totalorder %s13, 3
      %p72 = por %p70, %p71
      %p73 = scmp.ne.s32.totalorder %s65, %s68
      %p74 = scmp.eq.s32.totalorder %s13, 0
      %p75 = por %p73, %p74
      %p76 = scmp.ne.s32.totalorder %s65, %s68
      %p77 = scmp.eq.s32.totalorder %s18, 3
      %p78 = por %p76, %p77
      %p79 = scmp.ne.s32.totalorder %s68, %s69
      %p80 = scmp.eq.s32.totalorder %s18, 0
      %p81 = por %p79, %p80
      %p82 = scmp.ne.s32.totalorder %s68, %s69
      %p83 = scmp.eq.s32.totalorder %s19, 3
      %p84 = por %p82, %p83
      %p86 = scmp.ne.s32.totalorder %s69, %s85
      %p87 = scmp.eq.s32.totalorder %s19, 0
      %p88 = por %p86, %p87
      %p89 = scmp.le.s32.totalorder 1, %s13
      %p90 = scmp.lt.s32.totalorder %s13, 5
      %p91 = pnand %p89, %p90
      %p92 = pneg %p91
      // Predicated region
      $region9: #{tpu_custom_call.1} parent=5 // pred_check
        _
      $region10: #{tpu_custom_call.1} parent=5 // pred_check_branch
        %94 = sbr.rel (%p91) target = $region12
      $region11: #{tpu_custom_call.1} parent=5 // pred_region
        %s95 = ssub.s32 %s13, 1
      $region12: #{tpu_custom_call.1} parent=5 // pred_fallthru
        _
      %p96 = scmp.lt.s32.totalorder %s13, 4
      // Predicated region
      $region13: #{tpu_custom_call.1} parent=5 // pred_check
        %p97 = pneg %p96
      $region14: #{tpu_custom_call.1} parent=5 // pred_check_branch
        %99 = sbr.rel (%p97) target = $region16
      $region15: #{tpu_custom_call.1} parent=5 // pred_region
        // Predicated region
        $region17: #{tpu_custom_call.1} parent=15 // pred_check
          %p100 = pneg %p47
        $region18: #{tpu_custom_call.1} parent=15 // pred_check_branch
          %102 = sbr.rel (%p100) target = $region20
        $region19: #{tpu_custom_call.1} parent=15 // pred_region
          %s103 = sand.u32 %s37, 1
          %s104 = scalar_lea.sflag [#allocation3], %s103
          %s105 = sand.u32 %s37, 1
          %s106 = smul.addr %s105, 4
          %s107 = scalar_lea.vmem [#allocation2], %s106
          %s109 = ssub.s32 64, 64
          %110 = vsyncadd %s104, %s109
          %s111 = smul.addr %s20, 2
          %s112 = sadd.s32 %s21, %s111
          %s113 = smul.addr %s112, 64
          %s114 = scalar_lea.hbm %s0, %s113
          %s116 = sshll.u32 %s107, 4
          %s117 = int_to_ptr.vmem [resolvable:$true] %s116
          %119 = dma.hbm_to_vmem [thread:$0]  %s114, 64, %s117, %s104
        $region20: #{tpu_custom_call.1} parent=15 // pred_fallthru
          _
      $region16: #{tpu_custom_call.1} parent=5 // pred_fallthru
        _
      %p120 = scmp.le.s32.totalorder 1, %s13
      %p121 = scmp.lt.s32.totalorder %s13, 5
      %p122 = pnand %p120, %p121
      %p123 = pneg %p122
      // Predicated region
      $region21: #{tpu_custom_call.1} parent=5 // pred_check
        _
      $region22: #{tpu_custom_call.1} parent=5 // pred_check_branch
        %125 = sbr.rel (%p122) target = $region24
      $region23: #{tpu_custom_call.1} parent=5 // pred_region
        %s126 = ssub.s32 %s13, 1
        %s127 = sand.u32 %s40, 1
        %s128 = scalar_lea.sflag [#allocation3], %s127
        %s129 = sand.u32 %s40, 1
        %s130 = smul.addr %s129, 4
        %s131 = scalar_lea.vmem [#allocation2], %s130
        // Predicated region
        $region25: #{tpu_custom_call.1} parent=23 // pred_check
          %p132 = pneg %p53
        $region26: #{tpu_custom_call.1} parent=23 // pred_check_branch
          %134 = sbr.rel (%p132) target = $region28
        $region27: #{tpu_custom_call.1} parent=23 // pred_region
          %135 = dma.done %s128, 64
        $region28: #{tpu_custom_call.1} parent=23 // pred_fallthru
          _
        %s136 = sand.u32 %s40, 1
        %s137 = scalar_lea.sflag [#allocation3], %s136
        %s138 = sand.u32 %s40, 1
        %s139 = smul.addr %s138, 4
        %s140 = scalar_lea.vmem [#allocation2], %s139
        %p141 = pneg %p53
        %p142 = pneg %p50
        %p143 = pneg %p81
        %p144 = pneg %p78
        %s145 = sand.u32 %s68, 1
        %s146 = scalar_lea.sflag [#allocation4], %s145
        %s147 = sand.u32 %s68, 1
        %s148 = smul.addr %s147, 4
        %s149 = scalar_lea.vmem [#allocation5], %s148
        %v150 = vld [vmem:[%s131] sm:$0xf]
        %v151 = vmul.f32 %v150, %v150
        %vm152 = vcmask 1043456
        %v153 = vsel %vm152, %v151, 0.0
        %v154 = vrot.slane %v153, 4
        %v155 = vadd.f32 %v153, %v154
        %v156 = vrot.slane %v155, 2
        %v157 = vadd.f32 %v155, %v156
        %v158 = vrot.slane %v157, 1
        %v159 = vadd.f32 %v157, %v158
        %v160 = vrcp.pop 4.0
        %v161 = vmul.f32 %v159, %v160
        %v162 = vadd.f32 %v161, 1e-08
        %v163 = vrsqrt.pop %v162
        %v164 = vmul.f32 %v150, %v163
        %165 = vst [vmem:[%s149] sm:$0xf] %v164
        %s166 = sand.u32 %s68, 1
        %s167 = scalar_lea.sflag [#allocation4], %s166
        %s168 = sand.u32 %s68, 1
        %s169 = smul.addr %s168, 4
        %s170 = scalar_lea.vmem [#allocation5], %s169
        // Predicated region
        $region29: #{tpu_custom_call.1} parent=23 // pred_check
          %p171 = pneg %p78
        $region30: #{tpu_custom_call.1} parent=23 // pred_check_branch
          %173 = sbr.rel (%p171) target = $region32
        $region31: #{tpu_custom_call.1} parent=23 // pred_region
          %s175 = ssub.s32 64, 64
          %176 = vsyncadd %s167, %s175
          %s177 = smul.addr %s22, 2
          %s178 = sadd.s32 %s23, %s177
          %s179 = smul.addr %s178, 64
          %s180 = scalar_lea.hbm %s1, %s179
          %s182 = sshll.u32 %s170, 4
          %s183 = int_to_ptr.vmem [resolvable:$true] %s182
          %185 = dma.vmem_to_hbm [thread:$0]  %s183, 64, %s180, %s167
        $region32: #{tpu_custom_call.1} parent=23 // pred_fallthru
          _
      $region24: #{tpu_custom_call.1} parent=5 // pred_fallthru
        _
      %p186 = scmp.le.s32.totalorder 2, %s13
      // Predicated region
      $region33: #{tpu_custom_call.1} parent=5 // pred_check
        %p187 = pneg %p186
      $region34: #{tpu_custom_call.1} parent=5 // pred_check_branch
        %189 = sbr.rel (%p187) target = $region36
      $region35: #{tpu_custom_call.1} parent=5 // pred_region
        %s190 = ssub.s32 %s13, 2
        // Predicated region
        $region37: #{tpu_custom_call.1} parent=35 // pred_check
          %p191 = pneg %p84
        $region38: #{tpu_custom_call.1} parent=35 // pred_check_branch
          %193 = sbr.rel (%p191) target = $region40
        $region39: #{tpu_custom_call.1} parent=35 // pred_region
          %s194 = sand.u32 %s69, 1
          %s195 = scalar_lea.sflag [#allocation4], %s194
          %s196 = sand.u32 %s69, 1
          %s197 = smul.addr %s196, 4
          %s198 = scalar_lea.vmem [#allocation5], %s197
          %199 = dma.done %s195, 64
        $region40: #{tpu_custom_call.1} parent=35 // pred_fallthru
          _
      $region36: #{tpu_custom_call.1} parent=5 // pred_fallthru
        _
    $region6: #{tpu_custom_call.1} parent=1 // loop_footer
      %s17 = sadd.s32 1, %s13
    $region7: #{tpu_custom_call.1} parent=1 // loop_footer_branch
      %12 = sbr.rel target = $region3
    $region8: #{tpu_custom_call.1} parent=1 // loop_exit
      _
    %200 = vsyncpa [#allocation3], 1
    %s201 = scalar_lea.sflag [#allocation3], 1
    %202 = vsyncpa %s201, 1
    %203 = vsyncpa [#allocation4], 1
    %s204 = scalar_lea.sflag [#allocation4], 1
    %205 = vsyncpa %s204, 1

</llo_original>
